<compile_context>
chip_gen: v7x
topology: tpu7x:2x2x1
jax: 0.10.0
libtpu: 0.0.40
codegen_flags: <defaults>
</compile_context>

<pallas_src>
import functools

import jax
import jax.numpy as jnp
from jax.experimental import pallas as pl
from jax.experimental.pallas import tpu as pltpu

# TODO(synk): AutoencoderKL.encode + latent_dist.sample() (full VAE conv stack + gaussian
#             reparameterization) has no clean Pallas equivalent; the kernel consumes the
#             4-channel latent tensor directly.


def _cdiv(a, b):
    return -(-a // b)


def _round_up(x, m):
    return _cdiv(x, m) * m


# ----------------------------- Pallas kernel ------------------------------- #
def _adapter_matmul_kernel(x_ref, w_ref, o_ref):
    # x_ref: (tm, K) bf16 patch rows, w_ref: (K, tn) bf16 weight slab,
    # o_ref: (tm, tn) bf16 output.  f32 accumulation on the MXU.
    o_ref[...] = jnp.dot(
        x_ref[...], w_ref[...], preferred_element_type=jnp.float32
    ).astype(o_ref.dtype)


def _pick_tn(D, tn_max):
    """Largest tile <= tn_max dividing D; prefer multiples of 256 (full v6e MXU width)."""
    for align in (256, 128):
        t = (min(tn_max, D) // align) * align
        while t >= align:
            if D % t == 0:
                return t
            t -= align
    return D


def adapter_linear(patches, weight_t, *, tm_max=256, tn_max=1024):
    """patches: [M, K] bf16 (K unpadded), weight_t: [K, D] bf16 (D % 128 == 0) -> [M, D]."""
    M, K = patches.shape
    K2, D = weight_t.shape
    assert K == K2, (K, K2)
    assert D % 128 == 0, "pad output dim to a multiple of 128 (prepare_adapter_weight)"

    tn = _pick_tn(D, tn_max)
    n_j = D // tn

    # Balanced row tiles (limits M-pad waste); if the grid would collapse to a single program,
    # split M so v7x's second TensorCore also gets work (one extra ~0.35us step elsewhere).
    n_i = max(1, _cdiv(M, tm_max))
    if n_i == 1 and n_j == 1 and M >= 32:
        n_i = 2
    tm = _round_up(_cdiv(M, n_i), 16)               # (16,128) native bf16 tile
    if _round_up(M, tm) - M > max(8, M // 8):       # >~15% pad waste -> relax to 8-row alignment
        tm = _round_up(_cdiv(M, n_i), 8)
    M_pad = _round_up(M, tm)
    if M_pad != M:
        patches = jnp.pad(patches, ((0, M_pad - M), (0, 0)))

    # Weight-column tile OUTER, row tile INNER: the weight block index is constant along the
    # inner axis, so each (K, tn) slab is DMA'd exactly once (weight HBM traffic = K*D bytes).
    grid = (n_j, M_pad // tm)

    # VMEM budget from the actual double-buffered block bytes plus headroom for Mosaic scratch.
    dsz = jnp.dtype(patches.dtype).itemsize
    block_bytes = 2 * dsz * (tm * K + K * tn + tm * tn)
    vmem_limit = int(min(48 << 20, max(32 << 20, 4 * block_bytes)))

    # TODO(synk): for adapters with K >> 1024 add a K grid axis (last, "arbitrary") with an
    #             f32 VMEM accumulator and pl.when init/finalize.
    out = pl.pallas_call(
        _adapter_matmul_kernel,
        out_shape=jax.ShapeDtypeStruct((M_pad, D), patches.dtype),
        grid_spec=pltpu.PrefetchScalarGridSpec(
            num_scalar_prefetch=0,
            grid=grid,
            in_specs=[
                pl.BlockSpec((tm, K), lambda j, i: (i, 0)),
                pl.BlockSpec((K, tn), lambda j, i: (0, j)),
            ],
            out_specs=pl.BlockSpec((tm, tn), lambda j, i: (i, j)),
        ),
        compiler_params=pltpu.CompilerParams(
            dimension_semantics=("parallel", "parallel"),
            vmem_limit_bytes=vmem_limit,
        ),
    )(patches, weight_t)
    return out[:M] if M_pad != M else out


# ------------------------------ JAX glue ------------------------------------ #
def prepare_adapter_weight(linear_weight):
    """One-time weight prep (call OUTSIDE jit, at weight-load time).

    torch nn.Linear weight [text_dim, K] -> transposed [K, D_pad] with only the OUTPUT dim
    zero-padded to a lane-dense multiple of 128.  K is NOT padded: the kernel contracts over
    the true K (full-array blocks on the last dim are layout-legal), so no per-call pad pass.
    """
    D, K = linear_weight.shape
    D_pad = _round_up(D, 128)
    w_t = jnp.transpose(linear_weight)  # [K, D]
    if D_pad != D:
        w_t = jnp.pad(w_t, ((0, 0), (0, D_pad - D)))
    return w_t


def patch_encode(x, patch_size):
    """Patch.encoder: NCHW -> [B, N_patches, C*P*P] via a SINGLE fused 6-D transpose.

    Identical element ordering to torch unfold(2,p,p).unfold(3,p,p) -> reshape ->
    transpose(1,2) -> reshape: channel-major, then patch-row, patch-col inside each vector.
    """
    B, C, H, W = x.shape
    p = patch_size
    gh, gw = H // p, W // p
    x = x.reshape(B, C, gh, p, gw, p).transpose(0, 2, 4, 1, 3, 5)  # one HBM copy
    return x.reshape(B, gh * gw, C * p * p)


@functools.partial(jax.jit, static_argnames=("patch_size", "text_dim"))
def visual_adapter_forward(x, weight_t_padded, *, patch_size, text_dim):
    """x: [B, C, H, W] bf16 latent, weight_t_padded: [K, D_pad] bf16 (pre-transposed)."""
    B, C, H, W = x.shape
    N = (H // patch_size) * (W // patch_size)
    K = C * patch_size * patch_size
    K_w, D_pad = weight_t_padded.shape
    assert K_w == K, (K_w, K)

    # TODO(synk): patchification could be fused into the Pallas kernel (BlockSpec pulling
    #             (1,C,H,W) slabs + in-VMEM rearrange) to drop this one HBM copy; kept in XLA
    #             for robust lowering since activation traffic << weight traffic here.
    patches = patch_encode(x, patch_size).reshape(B * N, K)

    out = adapter_linear(patches, weight_t_padded)          # [B*N, D_pad]
    if D_pad != text_dim:
        out = out[:, :text_dim]
    return out.reshape(B, N, text_dim)


# -------------------------------- demo -------------------------------------- #
if __name__ == "__main__":
    # Small module-consistent shapes: latent B=2, C=4, H=W=16, patch=4, text_dim=128
    #   -> N = 16 patches/img, K = 64 (unpadded), M = B*N = 32 -> grid (1 D-tile, 2 row tiles).
    B, C, IMG, PATCH, TEXT_DIM = 2, 4, 16, 4, 128
    K = C * PATCH * PATCH

    key = jax.random.PRNGKey(0)
    kx, kw = jax.random.split(key)
    x = jax.random.normal(kx, (B, C, IMG, IMG), dtype=jnp.float32).astype(jnp.bfloat16)
    # nn.Linear(K, TEXT_DIM, bias=False): torch weight layout [TEXT_DIM, K].
    w = (jax.random.normal(kw, (TEXT_DIM, K), dtype=jnp.float32) * 0.02).astype(jnp.bfloat16)

    # One-time weight prep (transpose + D pad) hoisted out of the jitted forward.
    w_t = prepare_adapter_weight(w)

    out = visual_adapter_forward(x, w_t, patch_size=PATCH, text_dim=TEXT_DIM)
    out = jax.block_until_ready(out)

    # Correctness vs plain-JAX f32 reference using the original (untransposed) weight.
    ref = jnp.einsum(
        "bnk,dk->bnd",
        patch_encode(x, PATCH).astype(jnp.float32),
        w.astype(jnp.float32),
    )
    assert out.shape == (B, (IMG // PATCH) ** 2, TEXT_DIM)
    assert jnp.allclose(out.astype(jnp.float32), ref, atol=5e-2, rtol=5e-2)

    print("KERNEL_OK")
</pallas_src>

<mosaic_0001>
module attributes {stable_mosaic.version = 11 : i64} {
  func.func @_adapter_matmul_kernel(%arg0: i32, %arg1: i32, %arg2: memref<16x64xbf16, #tpu.memory_space<vmem>>, %arg3: memref<64x128xbf16, #tpu.memory_space<vmem>>, %arg4: memref<16x128xbf16, #tpu.memory_space<vmem>>) attributes {dimension_semantics = [#tpu.dimension_semantics<parallel>, #tpu.dimension_semantics<parallel>], iteration_bounds = array<i64: 1, 2>, scalar_prefetch = 0 : i64, scratch_operands = 0 : i64, tpu.core_type = #tpu.core_type<tc>, window_params = [{transform_indices = @transform_0, window_bounds = array<i64: 16, 64>}, {transform_indices = @transform_1, window_bounds = array<i64: 64, 128>}, {transform_indices = @transform_2, window_bounds = array<i64: 16, 128>}]} {
    %c0 = arith.constant 0 : index
    %c0_0 = arith.constant 0 : index
    %0 = vector.load %arg2[%c0, %c0_0] : memref<16x64xbf16, #tpu.memory_space<vmem>>, vector<16x64xbf16>
    %c0_1 = arith.constant 0 : index
    %c0_2 = arith.constant 0 : index
    %1 = vector.load %arg3[%c0_1, %c0_2] : memref<64x128xbf16, #tpu.memory_space<vmem>>, vector<64x128xbf16>
    %cst = arith.constant dense<0.000000e+00> : vector<16x128xf32>
    %2 = tpu.matmul %0, %1, %cst {dimension_numbers = #tpu.dot_dimension_numbers<[1], [0], [0], [1], [0, 0, 1, 1], [], []>} : vector<16x64xbf16>, vector<64x128xbf16>, vector<16x128xf32> -> vector<16x128xf32>
    %3 = arith.truncf %2 : vector<16x128xf32> to vector<16x128xbf16>
    %c0_3 = arith.constant 0 : index
    %c0_4 = arith.constant 0 : index
    %4 = vector.load %arg4[%c0_3, %c0_4] : memref<16x128xbf16, #tpu.memory_space<vmem>>, vector<16x128xbf16>
    tpu.vector_store %arg4[%c0_3, %c0_4], %3 {strides = array<i32>} : memref<16x128xbf16, #tpu.memory_space<vmem>>, vector<16x128xbf16>,
    return
  }
  func.func @transform_0(%arg0: i32, %arg1: i32) -> (i32, i32) {
    %c0_i32 = arith.constant 0 : i32
    %c0_i32_0 = arith.constant 0 : i32
    return %arg1, %c0_i32 : i32, i32
  }
  func.func @transform_1(%arg0: i32, %arg1: i32) -> (i32, i32) {
    %c0_i32 = arith.constant 0 : i32
    %c0_i32_0 = arith.constant 0 : i32
    return %c0_i32, %arg0 : i32, i32
  }
  func.func @transform_2(%arg0: i32, %arg1: i32) -> (i32, i32) {
    %c0_i32 = arith.constant 0 : i32
    return %arg1, %arg0 : i32, i32
  }
}

</mosaic_0001>

<llo_original>
// kernel: visual_adapter_forward.1
$region0: #{visual_adapter_forward.1}
  #allocation0 [shape = 'u32[]', space=smem, size = 0x4, offset = 0x4, fixed_abs, tag = 'smem constant byte address 0x4 - core index']
  #allocation1 [shape = 'u32[144,128]{1,0:T(1,128)}', space=vmem, size = 0x12000, scoped, tag = 'internal scratch']
  %s0 = inlined_call_operand.vmem [shape: bf16[32,64], index: 0, kind: input, shape index: {}]
  %s1 = inlined_call_operand.vmem [shape: bf16[64,128], index: 1, kind: input, shape index: {}]
  %s2 = inlined_call_operand.hbm [shape: bf16[32,128], index: 2, kind: output, shape index: {}]
  %s3 = sld [smem:[#allocation0]]
  $region41: #{visual_adapter_forward.1} parent=0
    _
  %s5 = ssub.s32 1, %s3
  %s6 = scalar_select 0, %s5, %s3
  $region1: #{visual_adapter_forward.1} parent=0
    #allocation2 [shape = 'u8[8192]{0}', space=vmem, size = 0x2000, scoped, tag = 'output window, operand 0']
    #allocation3 [shape = 's32[2]{0}', space=sflag, size = 0x8, scoped, tag = 'scoped memory for visual_adapter_forward.1']
    %7 = vsyncpa [#allocation3], 0
    %s8 = scalar_lea.sflag [#allocation3], 1
    %9 = vsyncpa %s8, 0
    loop: start=0, step=1, limit=4
    $region2: #{visual_adapter_forward.1} parent=1 // loop_pre_header
      _
    $region3: #{visual_adapter_forward.1} parent=1 // loop_header
      %s11 = sphi 0, %s15
      %p12 = scmp.ge.s32.totalorder %s11, 4
      %s18 = sphi 0, %s30
      %s19 = sphi 0, %s26
      %s20 = sphi 0, %s18
      %s21 = sphi 0, %s19
      %s22 = sphi 0, %s20
      %s23 = sphi 0, %s21
      %s33 = sphi 0, %s35
      %s36 = sphi 0, %s33
      %s37 = sphi 0, %s36
      %s53 = sphi 0, %s37
      %s59 = sphi 0, %s61
      %s62 = sphi 0, %s59
      %s63 = sphi 0, %s62
      %s79 = sphi 0, %s63
      %s87 = sphi 0, %s89
      %s90 = sphi 0, %s87
      %s91 = sphi 0, %s90
      %s107 = sphi 0, %s91
    $region4: #{visual_adapter_forward.1} parent=1 // loop_header_branch
      %14 = sbr.rel (%p12) target = $region8
    $region5: #{visual_adapter_forward.1} parent=1 // loop_body
      %s16 = ssub.s32 %s11, 1
      %s17 = ssub.s32 %s11, 2
      %s24 = sadd.s32 1, %s19
      %p25 = scmp.ge.s32.totalorder %s24, 2
      %s26 = scalar_select %p25, 0, %s24
      %s27 = sadd.s32 1, %s18
      %s28 = scalar_select %p25, %s27, %s18
      %p29 = scmp.ge.s32.totalorder %s28, 1
      %s30 = scalar_select %p29, 0, %s28
      %s31 = ssub.s32 %s19, %s26
      %p32 = scmp.eq.s32.totalorder %s31, 0
      %s34 = sadd.s32 %s33, 1
      %s35 = scalar_select %p32, %s33, %s34
      %p38 = pneg %p32
      %p39 = scmp.eq.s32.totalorder %s11, 1
      %p40 = por %p38, %p39
      %p41 = scmp.ne.s32.totalorder %s33, %s36
      %p42 = scmp.eq.s32.totalorder %s11, 0
      %p43 = por %p41, %p42
      %p44 = scmp.ne.s32.totalorder %s33, %s36
      %p45 = scmp.eq.s32.totalorder %s16, 1
      %p46 = por %p44, %p45
      %p47 = scmp.ne.s32.totalorder %s36, %s37
      %p48 = scmp.eq.s32.totalorder %s16, 0
      %p49 = por %p47, %p48
      %p50 = scmp.ne.s32.totalorder %s36, %s37
      %p51 = scmp.eq.s32.totalorder %s17, 1
      %p52 = por %p50, %p51
      %p54 = scmp.ne.s32.totalorder %s37, %s53
      %p55 = scmp.eq.s32.totalorder %s17, 0
      %p56 = por %p54, %p55
      %s57 = ssub.s32 %s18, %s30
      %p58 = scmp.eq.s32.totalorder %s57, 0
      %s60 = sadd.s32 %s59, 1
      %s61 = scalar_select %p58, %s59, %s60
      %p64 = pneg %p58
      %p65 = scmp.eq.s32.totalorder %s11, 1
      %p66 = por %p64, %p65
      %p67 = scmp.ne.s32.totalorder %s59, %s62
      %p68 = scmp.eq.s32.totalorder %s11, 0
      %p69 = por %p67, %p68
      %p70 = scmp.ne.s32.totalorder %s59, %s62
      %p71 = scmp.eq.s32.totalorder %s16, 1
      %p72 = por %p70, %p71
      %p73 = scmp.ne.s32.totalorder %s62, %s63
      %p74 = scmp.eq.s32.totalorder %s16, 0
      %p75 = por %p73, %p74
      %p76 = scmp.ne.s32.totalorder %s62, %s63
      %p77 = scmp.eq.s32.totalorder %s17, 1
      %p78 = por %p76, %p77
      %p80 = scmp.ne.s32.totalorder %s63, %s79
      %p81 = scmp.eq.s32.totalorder %s17, 0
      %p82 = por %p80, %p81
      %s83 = ssub.s32 %s19, %s26
      %s84 = ssub.s32 %s18, %s30
      %s85 = sor.u32 %s83, %s84
      %p86 = scmp.eq.s32.totalorder %s85, 0
      %s88 = sadd.s32 %s87, 1
      %s89 = scalar_select %p86, %s87, %s88
      %p92 = pneg %p86
      %p93 = scmp.eq.s32.totalorder %s11, 1
      %p94 = por %p92, %p93
      %p95 = scmp.ne.s32.totalorder %s87, %s90
      %p96 = scmp.eq.s32.totalorder %s11, 0
      %p97 = por %p95, %p96
      %p98 = scmp.ne.s32.totalorder %s87, %s90
      %p99 = scmp.eq.s32.totalorder %s16, 1
      %p100 = por %p98, %p99
      %p101 = scmp.ne.s32.totalorder %s90, %s91
      %p102 = scmp.eq.s32.totalorder %s16, 0
      %p103 = por %p101, %p102
      %p104 = scmp.ne.s32.totalorder %s90, %s91
      %p105 = scmp.eq.s32.totalorder %s17, 1
      %p106 = por %p104, %p105
      %p108 = scmp.ne.s32.totalorder %s91, %s107
      %p109 = scmp.eq.s32.totalorder %s17, 0
      %p110 = por %p108, %p109
      %p111 = scmp.le.s32.totalorder 1, %s11
      %p112 = scmp.lt.s32.totalorder %s11, 3
      %p113 = pnand %p111, %p112
      %p114 = pneg %p113
      // Predicated region
      $region9: #{visual_adapter_forward.1} parent=5 // pred_check
        _
      $region10: #{visual_adapter_forward.1} parent=5 // pred_check_branch
        %116 = sbr.rel (%p113) target = $region12
      $region11: #{visual_adapter_forward.1} parent=5 // pred_region
        %s117 = ssub.s32 %s11, 1
        // Predicated region
        $region13: #{visual_adapter_forward.1} parent=11 // pred_check
          %p118 = pneg %p75
        $region14: #{visual_adapter_forward.1} parent=11 // pred_check_branch
          %120 = sbr.rel (%p118) target = $region16
        $region15: #{visual_adapter_forward.1} parent=11 // pred_region
          %p121 = scmp.lt.s32.totalorder %s20, 0
          %s122 = scalar_select %p121, %s20, 0
          %s123 = smul.addr %s122, 4
          %s124 = scalar_lea.vmem %s1, %s123
        $region16: #{visual_adapter_forward.1} parent=11 // pred_fallthru
          _
      $region12: #{visual_adapter_forward.1} parent=5 // pred_fallthru
        _
      %p125 = scmp.lt.s32.totalorder %s11, 2
      // Predicated region
      $region17: #{visual_adapter_forward.1} parent=5 // pred_check
        %p126 = pneg %p125
      $region18: #{visual_adapter_forward.1} parent=5 // pred_check_branch
        %128 = sbr.rel (%p126) target = $region20
      $region19: #{visual_adapter_forward.1} parent=5 // pred_region
        // Predicated region
        $region21: #{visual_adapter_forward.1} parent=19 // pred_check
          %p129 = pneg %p43
        $region22: #{visual_adapter_forward.1} parent=19 // pred_check_branch
          %131 = sbr.rel (%p129) target = $region24
        $region23: #{visual_adapter_forward.1} parent=19 // pred_region
          %s132 = smul.u32 2, %s19
          %p133 = scmp.lt.s32.totalorder %s132, 3
          %s134 = scalar_select %p133, %s132, 3
          %s135 = smul.addr %s134, 4
          %s136 = scalar_lea.vmem %s0, %s135
          %s137 = smul.u32 2, %s19
        $region24: #{visual_adapter_forward.1} parent=19 // pred_fallthru
          _
      $region20: #{visual_adapter_forward.1} parent=5 // pred_fallthru
        _
      %p138 = scmp.le.s32.totalorder 1, %s11
      %p139 = scmp.lt.s32.totalorder %s11, 3
      %p140 = pnand %p138, %p139
      %p141 = pneg %p140
      // Predicated region
      $region25: #{visual_adapter_forward.1} parent=5 // pred_check
        _
      $region26: #{visual_adapter_forward.1} parent=5 // pred_check_branch
        %143 = sbr.rel (%p140) target = $region28
      $region27: #{visual_adapter_forward.1} parent=5 // pred_region
        %s144 = ssub.s32 %s11, 1
        %s145 = smul.u32 2, %s21
        %p146 = scmp.lt.s32.totalorder %s145, 3
        %s147 = scalar_select %p146, %s145, 3
        %s148 = smul.addr %s147, 4
        %s149 = scalar_lea.vmem %s0, %s148
        %p150 = pneg %p49
        %p151 = pneg %p46
        %p152 = scmp.lt.s32.totalorder %s20, 0
        %s153 = scalar_select %p152, %s20, 0
        %s154 = smul.addr %s153, 4
        %s155 = scalar_lea.vmem %s1, %s154
        %p156 = pneg %p75
        %p157 = pneg %p72
        %p158 = pneg %p103
        %p159 = pneg %p100
        %s160 = sand.u32 %s90, 1
        %s161 = scalar_lea.sflag [#allocation3], %s160
        %s162 = sand.u32 %s90, 1
        %s163 = smul.addr %s162, 8
        %s164 = scalar_lea.vmem [#allocation2], %s163
        %s165 = smul.u32 2, %s21
        %p166 = scmp.lt.s32.totalorder %s165, 3
        %s167 = scalar_select %p166, %s165, 3
        %s168 = smul.addr %s167, 4
        %s169 = scalar_lea.vmem %s0, %s168
        %s170 = smul.u32 2, %s21
        %p171 = scmp.lt.s32.totalorder %s20, 0
        %s172 = scalar_select %p171, %s20, 0
        %s173 = smul.addr %s172, 4
        %s174 = scalar_lea.vmem %s1, %s173
        %s175 = smul.u32 2, %s21
        %v177 = vld [vmem:[%s169] sm:$0xf]
        %v178 = vld [vmem:[%s169 + $0x4] sm:$0xf]
        %v179 = vld [vmem:[%s174] sm:$0xf]
        %v180 = vld [vmem:[%s174 + $0x4] sm:$0xf]
        %v181 = vld [vmem:[%s174 + $0x8] sm:$0xf]
        %v182 = vld [vmem:[%s174 + $0xc] sm:$0xf]
        %v183 = vld [vmem:[%s174 + $0x10] sm:$0xf]
        %v184 = vld [vmem:[%s174 + $0x14] sm:$0xf]
        %v185 = vld [vmem:[%s174 + $0x18] sm:$0xf]
        %v186 = vld [vmem:[%s174 + $0x1c] sm:$0xf]
        %v189 = vunpack.c.l.b16 %v177
        %v190 = vunpack.c.l.b16 %v178
        %v191 = vpack.c.b16 %v190, %v189
        %v200 = vunpack.c.l.b16 %v179
        %v201 = vunpack.c.l.b16 %v180
        %v202 = vunpack.c.l.b16 %v181
        %v203 = vunpack.c.l.b16 %v182
        %v204 = vunpack.c.l.b16 %v183
        %v205 = vunpack.c.l.b16 %v184
        %v206 = vunpack.c.l.b16 %v185
        %v207 = vunpack.c.l.b16 %v186
        %v208 = vpack.c.b16 %v201, %v200
        %v209 = vpack.c.b16 %v203, %v202
        %v210 = vpack.c.b16 %v205, %v204
        %v211 = vpack.c.b16 %v207, %v206
        %vm216 = vcmask 523264
        %v218 = vsel %vm216, %v191, 0
        %220 = vmatprep.subr.bf16.mxu0 0
        %221 = vmatpush1.bf16.msra.mxu0 %v208
        %222 = vmatprep.subr.bf16.mxu0 0
        %223 = vmatpush1.bf16.msra.mxu0 %v209
        %224 = vmatprep.subr.bf16.mxu0 0
        %225 = vmatpush1.bf16.msra.mxu0 %v210
        %226 = vmatprep.subr.bf16.mxu0 0
        %227 = vmatpush1.bf16.msra.mxu0 %v211
        %228 = vmatprep.subr.bf16.mxu0 0
        %229 = vmatpush1.bf16.msra.mxu0 0
        %230 = vmatprep.subr.bf16.mxu0 0
        %231 = vmatpush1.bf16.msra.mxu0 0
        %232 = vmatprep.subr.bf16.mxu0 0
        %233 = vmatpush1.bf16.msra.mxu0 0
        %234 = vmatprep.subr.bf16.mxu0 0
        %235 = vmatpush1.bf16.msra.mxu0 0
        %236 = vmatprep.subr.bf16.mxu0 0
        %237 = vmatpush1.bf16.msra.mxu0 0
        %238 = vmatprep.subr.bf16.mxu0 0
        %239 = vmatpush1.bf16.msra.mxu0 0
        %240 = vmatprep.subr.bf16.mxu0 0
        %241 = vmatpush1.bf16.msra.mxu0 0
        %242 = vmatprep.subr.bf16.mxu0 0
        %243 = vmatpush1.bf16.msra.mxu0 0
        %244 = vmatprep.subr.bf16.mxu0 0
        %245 = vmatpush1.bf16.msra.mxu0 0
        %246 = vmatprep.subr.bf16.mxu0 0
        %247 = vmatpush1.bf16.msra.mxu0 0
        %248 = vmatprep.subr.bf16.mxu0 0
        %249 = vmatpush1.bf16.msra.mxu0 0
        %250 = vmatprep.subr.bf16.mxu0 0
        %251 = vmatpush1.bf16.msra.mxu0 0
        %252 = vmatprep.mubr.bf16.mxu0 0
        %253 = vmatmul.mubr.bf16.gmra.mrb[0].mxu0 %v218
        %v254 = vpop.f32.mrb[0].mxu0
        %v255 = vadd.f32 0.0, %v254
        %v256 = vpop.f32.mrb[0].mxu0
        %v257 = vpop.f32.mrb[0].mxu0
        %v258 = vadd.f32 0.0, %v257
        %v259 = vpop.f32.mrb[0].mxu0
        %260 = vdwg.mxu0
        %v261 = vpack.c.bf16 %v258, %v255
        %v263 = vunpack.c.l.b16 %v261
        %v264 = vunpack.c.h.b16 %v261
        %v265 = vpack.c.b16 %v263, %v263
        %v266 = vpack.c.b16 %v264, %v264
        %269 = vst [vmem:[%s164] sm:$0xf] %v265
        %270 = vst [vmem:[%s164 + $0x4] sm:$0xf] %v266
        %s271 = sand.u32 %s90, 1
        %s272 = scalar_lea.sflag [#allocation3], %s271
        %s273 = sand.u32 %s90, 1
        %s274 = smul.addr %s273, 8
        %s275 = scalar_lea.vmem [#allocation2], %s274
        // Predicated region
        $region29: #{visual_adapter_forward.1} parent=27 // pred_check
          %p276 = pneg %p100
        $region30: #{visual_adapter_forward.1} parent=27 // pred_check_branch
          %278 = sbr.rel (%p276) target = $region32
        $region31: #{visual_adapter_forward.1} parent=27 // pred_region
          %s279 = smul.u32 2, %s21
          %s281 = ssub.s32 128, 128
          %282 = vsyncadd %s272, %s281
          %s283 = sadd.s32 %s20, %s279
          %s284 = smul.addr %s283, 64
          %s285 = scalar_lea.hbm %s2, %s284
          %s286 = sshll.u32 %s275, 4
          %s287 = int_to_ptr.vmem [resolvable:$true] %s286
          %292 = dma.vmem_to_hbm [thread:$0]  %s287, 128, %s285, %s272, 64, 64, 4
        $region32: #{visual_adapter_forward.1} parent=27 // pred_fallthru
          _
      $region28: #{visual_adapter_forward.1} parent=5 // pred_fallthru
        _
      %p293 = scmp.le.s32.totalorder 2, %s11
      // Predicated region
      $region33: #{visual_adapter_forward.1} parent=5 // pred_check
        %p294 = pneg %p293
      $region34: #{visual_adapter_forward.1} parent=5 // pred_check_branch
        %296 = sbr.rel (%p294) target = $region36
      $region35: #{visual_adapter_forward.1} parent=5 // pred_region
        %s297 = ssub.s32 %s11, 2
        // Predicated region
        $region37: #{visual_adapter_forward.1} parent=35 // pred_check
          %p298 = pneg %p106
        $region38: #{visual_adapter_forward.1} parent=35 // pred_check_branch
          %300 = sbr.rel (%p298) target = $region40
        $region39: #{visual_adapter_forward.1} parent=35 // pred_region
          %s301 = sand.u32 %s91, 1
          %s302 = scalar_lea.sflag [#allocation3], %s301
          %s303 = sand.u32 %s91, 1
          %s304 = smul.addr %s303, 8
          %s305 = scalar_lea.vmem [#allocation2], %s304
          %306 = dma.done %s302, 128
        $region40: #{visual_adapter_forward.1} parent=35 // pred_fallthru
          _
      $region36: #{visual_adapter_forward.1} parent=5 // pred_fallthru
        _
    $region6: #{visual_adapter_forward.1} parent=1 // loop_footer
      %s15 = sadd.s32 1, %s11
    $region7: #{visual_adapter_forward.1} parent=1 // loop_footer_branch
      %10 = sbr.rel target = $region3
    $region8: #{visual_adapter_forward.1} parent=1 // loop_exit
      _
    %307 = vsyncpa [#allocation3], 1
    %s308 = scalar_lea.sflag [#allocation3], 1
    %309 = vsyncpa %s308, 1

</llo_original>
